<compile_context>
chip_gen: v6e
topology: v6e:2x2x1
jax: 0.10.0
libtpu: 0.0.40
codegen_flags: <defaults>
</compile_context>

<pallas_src>
import functools

import jax
import jax.numpy as jnp
from jax.experimental import pallas as pl
from jax.experimental.pallas import tpu as pltpu


def _round_up(x, m):
    return -(-x // m) * m


def _device_kind():
    try:
        return jax.devices()[0].device_kind.lower()
    except Exception:
        return ""


def _head_kernel(x_ref, w1t_ref, b1_ref, w2t_ref, b2_ref, o_ref, *, act_in_bf16):
    # x: [TB, H], w1t: [H, D] (bf16), b1: [1, D] (f32),
    # w2t: [D, C_pad] (bf16), b2: [1, C_pad] (f32), o: [TB, C_pad] (f32)
    x = x_ref[...]
    if x.dtype != jnp.bfloat16:
        # Fallback for f32 features; prefer feeding bf16 activations upstream so the
        # dominant HBM read is already half-width (v6e is HBM-bound on this stream).
        x = x.astype(jnp.bfloat16)

    # dense: [TB, H] @ [H, D] — plain (non-transposed) MXU contraction against the
    # pre-transposed, pre-cast bf16 weight; f32 accumulation.
    h = jnp.dot(x, w1t_ref[...], preferred_element_type=jnp.float32)
    h = h + b1_ref[...]  # f32 bias add

    if act_in_bf16:
        # v6e/v7x: bf16 EUP tanh (h is cast to bf16 for the second matmul anyway).
        h = jnp.tanh(h.astype(jnp.bfloat16))
    else:
        # v5e: EUP has no bf16 — keep tanh in f32, then cast for the MXU.
        h = jnp.tanh(h).astype(jnp.bfloat16)

    # TODO(synk): dropout is identity in eval mode; a training-mode variant would
    # use pltpu.prng_seed / pltpu.prng_random_bits behind a flag.

    # out_proj: [TB, D] @ [D, C_pad]
    y = jnp.dot(h, w2t_ref[...], preferred_element_type=jnp.float32)
    o_ref[...] = (y + b2_ref[...]).astype(o_ref.dtype)


def prepare_head_params(w1, b1, w2, b2, *, weight_dtype=jnp.bfloat16):
    """One-time parameter preparation (do this at model init, not per forward call).

    w1: [inner_dim, input_dim]   b1: [inner_dim]      (PyTorch nn.Linear layouts)
    w2: [num_classes, inner_dim] b2: [num_classes]
    """
    D, H = w1.shape
    C = w2.shape[0]
    C_pad = max(128, _round_up(C, 128))  # lane-dense (unmasked vst) output width
    if C_pad != C:
        w2 = jnp.pad(w2, ((0, C_pad - C), (0, 0)))
        b2 = jnp.pad(b2, (0, C_pad - C))
    return {
        "w1t": jnp.asarray(w1, jnp.float32).T.astype(weight_dtype),   # [H, D]
        "b1": jnp.asarray(b1, jnp.float32).reshape(1, D),
        "w2t": jnp.asarray(w2, jnp.float32).T.astype(weight_dtype),   # [D, C_pad]
        "b2": jnp.asarray(b2, jnp.float32).reshape(1, C_pad),
        "num_classes": C,
    }


def roberta_classification_head(features, params, *, sent_label=False,
                                batch_tile=None, act_in_bf16=None,
                                slice_output=True):
    """Forward pass of RobertaClassificationHead (eval mode).

    features: [B, T, H] (or already-pooled [B, H] if sent_label=True), f32 or bf16.
    params:   dict from prepare_head_params().
    Returns f32 logits of shape [B, num_classes] (or [B, C_pad] if slice_output=False).
    """
    w1t, b1, w2t, b2 = params["w1t"], params["b1"], params["w2t"], params["b2"]
    C = params["num_classes"]
    H, D = w1t.shape
    C_pad = w2t.shape[1]

    if sent_label:
        x2d = features
        B = x2d.shape[0]
    else:
        B, T, Hf = features.shape
        assert Hf == H, "feature dim mismatch with dense weight"
        if H % 128 == 0:
            # Contiguous (free) reshape; the x BlockSpec below DMAs only the
            # token-0 columns [0, H) per row, fusing CLS pooling into the DMA.
            x2d = features.reshape(B, T * H)
        else:
            # TODO(synk): unaligned hidden dims fall back to a wrapper-side slice.
            x2d = features[:, 0, :]

    kind = _device_kind()
    is_v5 = "v5" in kind
    if batch_tile is None:
        batch_tile = 512 if is_v5 else 1024   # v5e: 16 MiB default scoped VMEM
    if act_in_bf16 is None:
        act_in_bf16 = not is_v5               # v5e EUP has no bf16

    # Tile selection:
    #  - tiny B: one full-batch block (block dim == array dim satisfies (8,128) rule)
    #  - otherwise aim for >=4 grid steps so the x DMA pipelines with compute and the
    #    "parallel" batch axis can shard across v7x's 2 TensorCores.
    # Note: when B % tb != 0 the partial last block carries padding rows; every op is
    # row-independent and padded output rows are masked/discarded, so this is benign
    # (do NOT add cross-row reductions to this kernel).
    if B <= 128:
        tb = B
    else:
        tb = min(batch_tile, max(128, _round_up(pl.cdiv(B, 4), 8)))
    grid = (pl.cdiv(B, tb),)

    x_itemsize = jnp.dtype(x2d.dtype).itemsize
    w_itemsize = jnp.dtype(w1t.dtype).itemsize

    vmem_need = int(2 * tb * H * x_itemsize                # double-buffered x stream
                    + 2 * tb * C_pad * 4                   # double-buffered output
                    + 2 * (w1t.size + w2t.size) * w_itemsize
                    + 2 * (b1.size + b2.size) * 4
                    + (8 << 20))                           # headroom for temporaries
    vmem_limit = int(min(64 << 20, max(32 << 20, vmem_need)))

    cost = pl.CostEstimate(
        flops=2 * B * (H * D + D * C_pad),
        transcendentals=B * D,
        bytes_accessed=int(B * H * x_itemsize
                           + (w1t.size + w2t.size) * w_itemsize
                           + (b1.size + b2.size) * 4
                           + B * C_pad * 4),
    )

    resident = lambda shape: pl.BlockSpec(shape, lambda i: (0, 0))

    out = pl.pallas_call(
        functools.partial(_head_kernel, act_in_bf16=act_in_bf16),
        out_shape=jax.ShapeDtypeStruct((B, C_pad), jnp.float32),
        grid=grid,
        in_specs=[
            pl.BlockSpec((tb, H), lambda i: (i, 0)),  # streams; cols [0, H) = CLS token
            resident((H, D)),                         # W1^T stays VMEM-resident (bf16)
            resident((1, D)),
            resident((D, C_pad)),                     # W2^T stays VMEM-resident (bf16)
            resident((1, C_pad)),
        ],
        out_specs=pl.BlockSpec((tb, C_pad), lambda i: (i, 0)),
        compiler_params=pltpu.CompilerParams(
            dimension_semantics=("parallel",),
            vmem_limit_bytes=vmem_limit),
        cost_estimate=cost,
    )(x2d, w1t, b1, w2t, b2)

    if slice_output and C_pad != C:
        # Consumers that can read the padded logits directly (argmax/softmax over :C)
        # should pass slice_output=False to skip this extra HBM round trip.
        return out[:, :C]
    return out


if __name__ == "__main__":
    key = jax.random.PRNGKey(0)
    k_feat, k_w1, k_b1, k_w2, k_b2 = jax.random.split(key, 5)

    B, T, input_dim = 16, 8, 128
    inner_dim, num_classes = 128, 4

    features = jax.random.normal(k_feat, (B, T, input_dim), dtype=jnp.float32)
    # nn.Linear parameter layouts: weight [out, in], bias [out].
    w1 = jax.random.normal(k_w1, (inner_dim, input_dim), dtype=jnp.float32) * 0.1
    b1 = jax.random.normal(k_b1, (inner_dim,), dtype=jnp.float32) * 0.1
    w2 = jax.random.normal(k_w2, (num_classes, inner_dim), dtype=jnp.float32) * 0.1
    b2 = jax.random.normal(k_b2, (num_classes,), dtype=jnp.float32) * 0.1

    # One-time weight prep (padding / transpose / bf16 cast) — outside the forward.
    params = prepare_head_params(w1, b1, w2, b2)

    out = roberta_classification_head(features, params)
    out = jax.block_until_ready(out)
    assert out.shape == (B, num_classes)
    assert out.dtype == jnp.float32

    x_cls = features[:, 0, :]

    # Sanity check against the pure-f32 PyTorch-equivalent math (kernel uses bf16
    # matmul inputs with f32 accumulation, so tolerances are loose).
    ref_f32 = jnp.tanh(x_cls @ w1.T + b1) @ w2.T + b2
    assert jnp.allclose(out, ref_f32, atol=5e-2, rtol=5e-2), "mismatch vs f32 reference"

    # sent_label=True path: features already pooled to [B, H].
    out2 = roberta_classification_head(x_cls, params, sent_label=True)
    out2 = jax.block_until_ready(out2)
    assert jnp.allclose(out2, out, atol=1e-5), "sent_label path mismatch"

    # bf16-feature fast path (no in-kernel cast, half the HBM read of the x stream).
    out3 = roberta_classification_head(features.astype(jnp.bfloat16), params)
    out3 = jax.block_until_ready(out3)
    assert jnp.allclose(out3, out, atol=1e-5), "bf16-input path mismatch"

    # Padded-logits path (consumer-side slice avoided).
    out_pad = roberta_classification_head(features, params, slice_output=False)
    out_pad = jax.block_until_ready(out_pad)
    assert out_pad.shape == (B, 128)
    assert jnp.allclose(out_pad[:, :num_classes], out, atol=1e-5), "padded path mismatch"

    print("KERNEL_OK")
</pallas_src>

<mosaic_0001>
module attributes {stable_mosaic.version = 11 : i64} {
  func.func @_head_kernel(%arg0: i32, %arg1: memref<16x128xf32, #tpu.memory_space<vmem>>, %arg2: memref<128x128xbf16, #tpu.memory_space<vmem>>, %arg3: memref<1x128xf32, #tpu.memory_space<vmem>>, %arg4: memref<128x128xbf16, #tpu.memory_space<vmem>>, %arg5: memref<1x128xf32, #tpu.memory_space<vmem>>, %arg6: memref<16x128xf32, #tpu.memory_space<vmem>>) attributes {dimension_semantics = [#tpu.dimension_semantics<parallel>], iteration_bounds = array<i64: 1>, scalar_prefetch = 0 : i64, scratch_operands = 0 : i64, tpu.core_type = #tpu.core_type<tc>, window_params = [{transform_indices = @transform_0, window_bounds = array<i64: 16, 128>}, {pipeline_mode = #tpu.pipeline_mode<synchronous>, transform_indices = @transform_1, window_bounds = array<i64: 128, 128>}, {pipeline_mode = #tpu.pipeline_mode<synchronous>, transform_indices = @transform_2, window_bounds = array<i64: 1, 128>}, {pipeline_mode = #tpu.pipeline_mode<synchronous>, transform_indices = @transform_3, window_bounds = array<i64: 128, 128>}, {pipeline_mode = #tpu.pipeline_mode<synchronous>, transform_indices = @transform_4, window_bounds = array<i64: 1, 128>}, {transform_indices = @transform_5, window_bounds = array<i64: 16, 128>}]} {
    %c0 = arith.constant 0 : index
    %c0_0 = arith.constant 0 : index
    %0 = vector.load %arg1[%c0, %c0_0] : memref<16x128xf32, #tpu.memory_space<vmem>>, vector<16x128xf32>
    %1 = arith.truncf %0 : vector<16x128xf32> to vector<16x128xbf16>
    %c0_1 = arith.constant 0 : index
    %c0_2 = arith.constant 0 : index
    %2 = vector.load %arg2[%c0_1, %c0_2] : memref<128x128xbf16, #tpu.memory_space<vmem>>, vector<128x128xbf16>
    %cst = arith.constant dense<0.000000e+00> : vector<16x128xf32>
    %3 = tpu.matmul %1, %2, %cst {dimension_numbers = #tpu.dot_dimension_numbers<[1], [0], [0], [1], [0, 0, 1, 1], [], []>} : vector<16x128xbf16>, vector<128x128xbf16>, vector<16x128xf32> -> vector<16x128xf32>
    %c0_3 = arith.constant 0 : index
    %c0_4 = arith.constant 0 : index
    %4 = vector.load %arg3[%c0_3, %c0_4] : memref<1x128xf32, #tpu.memory_space<vmem>>, vector<1x128xf32>
    %5 = vector.broadcast %4 : vector<1x128xf32> to vector<16x128xf32>
    %6 = arith.addf %3, %5 : vector<16x128xf32>
    %7 = arith.truncf %6 : vector<16x128xf32> to vector<16x128xbf16>
    %8 = math.tanh %7 : vector<16x128xbf16>
    %c0_5 = arith.constant 0 : index
    %c0_6 = arith.constant 0 : index
    %9 = vector.load %arg4[%c0_5, %c0_6] : memref<128x128xbf16, #tpu.memory_space<vmem>>, vector<128x128xbf16>
    %cst_7 = arith.constant dense<0.000000e+00> : vector<16x128xf32>
    %10 = tpu.matmul %8, %9, %cst_7 {dimension_numbers = #tpu.dot_dimension_numbers<[1], [0], [0], [1], [0, 0, 1, 1], [], []>} : vector<16x128xbf16>, vector<128x128xbf16>, vector<16x128xf32> -> vector<16x128xf32>
    %c0_8 = arith.constant 0 : index
    %c0_9 = arith.constant 0 : index
    %11 = vector.load %arg5[%c0_8, %c0_9] : memref<1x128xf32, #tpu.memory_space<vmem>>, vector<1x128xf32>
    %12 = vector.broadcast %11 : vector<1x128xf32> to vector<16x128xf32>
    %13 = arith.addf %10, %12 : vector<16x128xf32>
    %c0_10 = arith.constant 0 : index
    %c0_11 = arith.constant 0 : index
    %14 = vector.load %arg6[%c0_10, %c0_11] : memref<16x128xf32, #tpu.memory_space<vmem>>, vector<16x128xf32>
    tpu.vector_store %arg6[%c0_10, %c0_11], %13 {strides = array<i32>} : memref<16x128xf32, #tpu.memory_space<vmem>>, vector<16x128xf32>,
    return
  }
  func.func @transform_0(%arg0: i32) -> (i32, i32) {
    %c0_i32 = arith.constant 0 : i32
    %c0_i32_0 = arith.constant 0 : i32
    return %arg0, %c0_i32 : i32, i32
  }
  func.func @transform_1(%arg0: i32) -> (i32, i32) {
    %c0_i32 = arith.constant 0 : i32
    %c0_i32_0 = arith.constant 0 : i32
    %c0_i32_1 = arith.constant 0 : i32
    return %c0_i32, %c0_i32_0 : i32, i32
  }
  func.func @transform_2(%arg0: i32) -> (i32, i32) {
    %c0_i32 = arith.constant 0 : i32
    %c0_i32_0 = arith.constant 0 : i32
    %c0_i32_1 = arith.constant 0 : i32
    return %c0_i32, %c0_i32_0 : i32, i32
  }
  func.func @transform_3(%arg0: i32) -> (i32, i32) {
    %c0_i32 = arith.constant 0 : i32
    %c0_i32_0 = arith.constant 0 : i32
    %c0_i32_1 = arith.constant 0 : i32
    return %c0_i32, %c0_i32_0 : i32, i32
  }
  func.func @transform_4(%arg0: i32) -> (i32, i32) {
    %c0_i32 = arith.constant 0 : i32
    %c0_i32_0 = arith.constant 0 : i32
    %c0_i32_1 = arith.constant 0 : i32
    return %c0_i32, %c0_i32_0 : i32, i32
  }
  func.func @transform_5(%arg0: i32) -> (i32, i32) {
    %c0_i32 = arith.constant 0 : i32
    %c0_i32_0 = arith.constant 0 : i32
    return %arg0, %c0_i32 : i32, i32
  }
}

</mosaic_0001>

<llo_original>
// kernel: tpu_custom_call.1
$region0: #{tpu_custom_call.1}
  #allocation0 [shape = 'u32[]', space=smem, size = 0x4, offset = 0x4, fixed_abs, tag = 'smem constant byte address 0x4 - core index']
  #allocation1 [shape = 'u32[144,128]{1,0:T(1,128)}', space=vmem, size = 0x12000, scoped, tag = 'internal scratch']
  %s0 = inlined_call_operand.hbm [shape: f32[16,1024], index: 0, kind: input, shape index: {}]
  %s1 = inlined_call_operand.hbm [shape: bf16[128,128], index: 1, kind: input, shape index: {}]
  %s2 = inlined_call_operand.vmem [shape: f32[1,128], index: 2, kind: input, shape index: {}]
  %s3 = inlined_call_operand.hbm [shape: bf16[128,128], index: 3, kind: input, shape index: {}]
  %s4 = inlined_call_operand.vmem [shape: f32[1,128], index: 4, kind: input, shape index: {}]
  %s5 = inlined_call_operand.hbm [shape: f32[16,128], index: 5, kind: output, shape index: {}]
  %s6 = sld [smem:[#allocation0]]
  $region42: #{tpu_custom_call.1} parent=0
    _
  %s8 = ssub.s32 1, %s6
  %s9 = scalar_select 0, %s8, %s6
  $region1: #{tpu_custom_call.1} parent=0
    #allocation2 [shape = 'u8[8192]{0}', space=vmem, size = 0x2000, scoped, tag = 'input window, operand 0, single buffered']
    #allocation3 [shape = 's32[1]{0}', space=sflag, size = 0x4, scoped, tag = 'scoped memory for tpu_custom_call.1']
    #allocation4 [shape = 's32[1]{0}', space=sflag, size = 0x4, scoped, tag = 'scoped memory for tpu_custom_call.1']
    #allocation5 [shape = 'u8[32768]{0}', space=vmem, size = 0x8000, scoped, tag = 'input window, operand 1, single buffered']
    #allocation6 [shape = 's32[1]{0}', space=sflag, size = 0x4, scoped, tag = 'scoped memory for tpu_custom_call.1']
    #allocation7 [shape = 'u8[32768]{0}', space=vmem, size = 0x8000, scoped, tag = 'input window, operand 3, single buffered']
    #allocation8 [shape = 'u8[8192]{0}', space=vmem, size = 0x2000, scoped, tag = 'output window, operand 0, single buffered']
    %10 = vsyncpa [#allocation3], 0
    %11 = vsyncpa [#allocation6], 0
    %12 = vsyncpa [#allocation4], 0
    // Predicated region
    $region2: #{tpu_custom_call.1} parent=1 // pred_check
      _
    $region3: #{tpu_custom_call.1} parent=1 // pred_check_branch
      %14 = sbr.rel (0) target = $region5
    $region4: #{tpu_custom_call.1} parent=1 // pred_region
      %s16 = ssub.s32 256, 256
      %17 = vsyncadd [#allocation3], %s16
      %s18 = sshll.u32 [#allocation2], 4
      %s19 = int_to_ptr.vmem [resolvable:$true] %s18
      %24 = dma.hbm_to_vmem [thread:$0]  %s0, 256, %s19, [#allocation3], 1024, 128, 8
    $region5: #{tpu_custom_call.1} parent=1 // pred_fallthru
      _
    // Predicated region
    $region6: #{tpu_custom_call.1} parent=1 // pred_check
      _
    $region7: #{tpu_custom_call.1} parent=1 // pred_check_branch
      %26 = sbr.rel (0) target = $region9
    $region8: #{tpu_custom_call.1} parent=1 // pred_region
      %s28 = ssub.s32 1024, 1024
      %29 = vsyncadd [#allocation6], %s28
      %s30 = sshll.u32 [#allocation5], 4
      %s31 = int_to_ptr.vmem [resolvable:$true] %s30
      %36 = dma.hbm_to_vmem [thread:$0]  %s1, 1024, %s31, [#allocation6], 64, 64, 4
    $region9: #{tpu_custom_call.1} parent=1 // pred_fallthru
      _
    // Predicated region
    $region10: #{tpu_custom_call.1} parent=1 // pred_check
      _
    $region11: #{tpu_custom_call.1} parent=1 // pred_check_branch
      %38 = sbr.rel (0) target = $region13
    $region12: #{tpu_custom_call.1} parent=1 // pred_region
      _
    $region13: #{tpu_custom_call.1} parent=1 // pred_fallthru
      _
    // Predicated region
    $region14: #{tpu_custom_call.1} parent=1 // pred_check
      _
    $region15: #{tpu_custom_call.1} parent=1 // pred_check_branch
      %40 = sbr.rel (0) target = $region17
    $region16: #{tpu_custom_call.1} parent=1 // pred_region
      %s42 = ssub.s32 1024, 1024
      %43 = vsyncadd [#allocation6], %s42
      %s44 = sshll.u32 [#allocation7], 4
      %s45 = int_to_ptr.vmem [resolvable:$true] %s44
      %50 = dma.hbm_to_vmem [thread:$0]  %s3, 1024, %s45, [#allocation6], 64, 64, 4
    $region17: #{tpu_custom_call.1} parent=1 // pred_fallthru
      _
    // Predicated region
    $region18: #{tpu_custom_call.1} parent=1 // pred_check
      _
    $region19: #{tpu_custom_call.1} parent=1 // pred_check_branch
      %52 = sbr.rel (0) target = $region21
    $region20: #{tpu_custom_call.1} parent=1 // pred_region
      _
    $region21: #{tpu_custom_call.1} parent=1 // pred_fallthru
      _
    // Predicated region
    $region22: #{tpu_custom_call.1} parent=1 // pred_check
      _
    $region23: #{tpu_custom_call.1} parent=1 // pred_check_branch
      %54 = sbr.rel (0) target = $region25
    $region24: #{tpu_custom_call.1} parent=1 // pred_region
      %55 = dma.done [#allocation3], 256
    $region25: #{tpu_custom_call.1} parent=1 // pred_fallthru
      _
    // Predicated region
    $region26: #{tpu_custom_call.1} parent=1 // pred_check
      _
    $region27: #{tpu_custom_call.1} parent=1 // pred_check_branch
      %57 = sbr.rel (0) target = $region29
    $region28: #{tpu_custom_call.1} parent=1 // pred_region
      %58 = dma.done [#allocation6], 1024
    $region29: #{tpu_custom_call.1} parent=1 // pred_fallthru
      _
    // Predicated region
    $region30: #{tpu_custom_call.1} parent=1 // pred_check
      _
    $region31: #{tpu_custom_call.1} parent=1 // pred_check_branch
      %60 = sbr.rel (0) target = $region33
    $region32: #{tpu_custom_call.1} parent=1 // pred_region
      %61 = dma.done [#allocation6], 1024
    $region33: #{tpu_custom_call.1} parent=1 // pred_fallthru
      _
    %v63 = vld [vmem:[#allocation2] sm:$0xff]
    %v64 = vld [vmem:[#allocation2 + $0x8] sm:$0xff]
    %v65 = vpack.c.bf16 %v64, %v63
    %v66 = vld [vmem:[#allocation5] sm:$0xf]
    %v67 = vld [vmem:[#allocation5 + $0x4] sm:$0xf]
    %v68 = vld [vmem:[#allocation5 + $0x8] sm:$0xf]
    %v69 = vld [vmem:[#allocation5 + $0xc] sm:$0xf]
    %v70 = vld [vmem:[#allocation5 + $0x10] sm:$0xf]
    %v71 = vld [vmem:[#allocation5 + $0x14] sm:$0xf]
    %v72 = vld [vmem:[#allocation5 + $0x18] sm:$0xf]
    %v73 = vld [vmem:[#allocation5 + $0x1c] sm:$0xf]
    %v74 = vld [vmem:[#allocation5 + $0x20] sm:$0xf]
    %v75 = vld [vmem:[#allocation5 + $0x24] sm:$0xf]
    %v76 = vld [vmem:[#allocation5 + $0x28] sm:$0xf]
    %v77 = vld [vmem:[#allocation5 + $0x2c] sm:$0xf]
    %v78 = vld [vmem:[#allocation5 + $0x30] sm:$0xf]
    %v79 = vld [vmem:[#allocation5 + $0x34] sm:$0xf]
    %v80 = vld [vmem:[#allocation5 + $0x38] sm:$0xf]
    %v81 = vld [vmem:[#allocation5 + $0x3c] sm:$0xf]
    %v82 = vld [vmem:[%s2] sm:$0x1]
    %v84 = vlaneseq
    %v85 = vshrl.u32 %v84, 7
    %v86 = vsub.s32 0, %v85
    %v87 = vrot.slane %v82, %v86
    %v105 = vunpack.c.l.b16 %v66
    %v106 = vunpack.c.l.b16 %v67
    %v107 = vunpack.c.l.b16 %v68
    %v108 = vunpack.c.l.b16 %v69
    %v109 = vunpack.c.l.b16 %v70
    %v110 = vunpack.c.l.b16 %v71
    %v111 = vunpack.c.l.b16 %v72
    %v112 = vunpack.c.l.b16 %v73
    %v113 = vunpack.c.l.b16 %v74
    %v114 = vunpack.c.l.b16 %v75
    %v115 = vunpack.c.l.b16 %v76
    %v116 = vunpack.c.l.b16 %v77
    %v117 = vunpack.c.l.b16 %v78
    %v118 = vunpack.c.l.b16 %v79
    %v119 = vunpack.c.l.b16 %v80
    %v120 = vunpack.c.l.b16 %v81
    %v121 = vpack.c.b16 %v106, %v105
    %v122 = vpack.c.b16 %v108, %v107
    %v123 = vpack.c.b16 %v110, %v109
    %v124 = vpack.c.b16 %v112, %v111
    %v125 = vpack.c.b16 %v114, %v113
    %v126 = vpack.c.b16 %v116, %v115
    %v127 = vpack.c.b16 %v118, %v117
    %v128 = vpack.c.b16 %v120, %v119
    %137 = vmatprep.subr.bf16.mxu0 0
    %138 = vmatpush1.bf16.msra.mxu0 %v128
    %139 = vmatprep.subr.bf16.mxu0 0
    %140 = vmatpush1.bf16.msra.mxu0 %v127
    %141 = vmatprep.subr.bf16.mxu0 0
    %142 = vmatpush1.bf16.msra.mxu0 %v126
    %143 = vmatprep.subr.bf16.mxu0 0
    %144 = vmatpush1.bf16.msra.mxu0 %v125
    %145 = vmatprep.subr.bf16.mxu0 0
    %146 = vmatpush1.bf16.msra.mxu0 %v124
    %147 = vmatprep.subr.bf16.mxu0 0
    %148 = vmatpush1.bf16.msra.mxu0 %v123
    %149 = vmatprep.subr.bf16.mxu0 0
    %150 = vmatpush1.bf16.msra.mxu0 %v122
    %151 = vmatprep.subr.bf16.mxu0 0
    %152 = vmatpush1.bf16.msra.mxu0 %v121
    %153 = vmatprep.subr.bf16.mxu0 0
    %154 = vmatpush2.bf16.msra.mxu0 0
    %155 = vmatprep.subr.bf16.mxu0 0
    %156 = vmatpush2.bf16.msra.mxu0 0
    %157 = vmatprep.subr.bf16.mxu0 0
    %158 = vmatpush2.bf16.msra.mxu0 0
    %159 = vmatprep.subr.bf16.mxu0 0
    %160 = vmatpush2.bf16.msra.mxu0 0
    %161 = vmatprep.subr.bf16.mxu0 0
    %162 = vmatpush2.bf16.msra.mxu0 0
    %163 = vmatprep.subr.bf16.mxu0 0
    %164 = vmatpush2.bf16.msra.mxu0 0
    %165 = vmatprep.subr.bf16.mxu0 0
    %166 = vmatpush2.bf16.msra.mxu0 0
    %167 = vmatprep.subr.bf16.mxu0 0
    %168 = vmatpush2.bf16.msra.mxu0 0
    %169 = vmatprep.mubr.bf16.mxu0 0
    %170 = vmatmul.mubr.bf16.gmra.mxu0 %v65
    %v171 = vpop.f32.mrf.mxu0
    %v172 = vadd.f32 %v87, %v171
    %v173 = vpop.f32.mrf.mxu0
    %v174 = vpop.f32.mrf.mxu0
    %v175 = vadd.f32 %v87, %v174
    %v176 = vpop.f32.mrf.mxu0
    %177 = vdwg.mxu0
    %v178 = vpack.c.bf16 %v175, %v172
    %v179 = vtanh.bf16.pop %v178
    %v180 = vld [vmem:[#allocation7] sm:$0xf]
    %v181 = vld [vmem:[#allocation7 + $0x4] sm:$0xf]
    %v182 = vld [vmem:[#allocation7 + $0x8] sm:$0xf]
    %v183 = vld [vmem:[#allocation7 + $0xc] sm:$0xf]
    %v184 = vld [vmem:[#allocation7 + $0x10] sm:$0xf]
    %v185 = vld [vmem:[#allocation7 + $0x14] sm:$0xf]
    %v186 = vld [vmem:[#allocation7 + $0x18] sm:$0xf]
    %v187 = vld [vmem:[#allocation7 + $0x1c] sm:$0xf]
    %v188 = vld [vmem:[#allocation7 + $0x20] sm:$0xf]
    %v189 = vld [vmem:[#allocation7 + $0x24] sm:$0xf]
    %v190 = vld [vmem:[#allocation7 + $0x28] sm:$0xf]
    %v191 = vld [vmem:[#allocation7 + $0x2c] sm:$0xf]
    %v192 = vld [vmem:[#allocation7 + $0x30] sm:$0xf]
    %v193 = vld [vmem:[#allocation7 + $0x34] sm:$0xf]
    %v194 = vld [vmem:[#allocation7 + $0x38] sm:$0xf]
    %v195 = vld [vmem:[#allocation7 + $0x3c] sm:$0xf]
    %v196 = vld [vmem:[%s4] sm:$0x1]
    %v198 = vlaneseq
    %v199 = vshrl.u32 %v198, 7
    %v200 = vsub.s32 0, %v199
    %v201 = vrot.slane %v196, %v200
    %v219 = vunpack.c.l.b16 %v180
    %v220 = vunpack.c.l.b16 %v181
    %v221 = vunpack.c.l.b16 %v182
    %v222 = vunpack.c.l.b16 %v183
    %v223 = vunpack.c.l.b16 %v184
    %v224 = vunpack.c.l.b16 %v185
    %v225 = vunpack.c.l.b16 %v186
    %v226 = vunpack.c.l.b16 %v187
    %v227 = vunpack.c.l.b16 %v188
    %v228 = vunpack.c.l.b16 %v189
    %v229 = vunpack.c.l.b16 %v190
    %v230 = vunpack.c.l.b16 %v191
    %v231 = vunpack.c.l.b16 %v192
    %v232 = vunpack.c.l.b16 %v193
    %v233 = vunpack.c.l.b16 %v194
    %v234 = vunpack.c.l.b16 %v195
    %v235 = vpack.c.b16 %v220, %v219
    %v236 = vpack.c.b16 %v222, %v221
    %v237 = vpack.c.b16 %v224, %v223
    %v238 = vpack.c.b16 %v226, %v225
    %v239 = vpack.c.b16 %v228, %v227
    %v240 = vpack.c.b16 %v230, %v229
    %v241 = vpack.c.b16 %v232, %v231
    %v242 = vpack.c.b16 %v234, %v233
    %251 = vmatprep.subr.bf16.mxu0 0
    %252 = vmatpush1.bf16.msra.mxu0 %v242
    %253 = vmatprep.subr.bf16.mxu0 0
    %254 = vmatpush1.bf16.msra.mxu0 %v241
    %255 = vmatprep.subr.bf16.mxu0 0
    %256 = vmatpush1.bf16.msra.mxu0 %v240
    %257 = vmatprep.subr.bf16.mxu0 0
    %258 = vmatpush1.bf16.msra.mxu0 %v239
    %259 = vmatprep.subr.bf16.mxu0 0
    %260 = vmatpush1.bf16.msra.mxu0 %v238
    %261 = vmatprep.subr.bf16.mxu0 0
    %262 = vmatpush1.bf16.msra.mxu0 %v237
    %263 = vmatprep.subr.bf16.mxu0 0
    %264 = vmatpush1.bf16.msra.mxu0 %v236
    %265 = vmatprep.subr.bf16.mxu0 0
    %266 = vmatpush1.bf16.msra.mxu0 %v235
    %267 = vmatprep.subr.bf16.mxu0 0
    %268 = vmatpush2.bf16.msra.mxu0 0
    %269 = vmatprep.subr.bf16.mxu0 0
    %270 = vmatpush2.bf16.msra.mxu0 0
    %271 = vmatprep.subr.bf16.mxu0 0
    %272 = vmatpush2.bf16.msra.mxu0 0
    %273 = vmatprep.subr.bf16.mxu0 0
    %274 = vmatpush2.bf16.msra.mxu0 0
    %275 = vmatprep.subr.bf16.mxu0 0
    %276 = vmatpush2.bf16.msra.mxu0 0
    %277 = vmatprep.subr.bf16.mxu0 0
    %278 = vmatpush2.bf16.msra.mxu0 0
    %279 = vmatprep.subr.bf16.mxu0 0
    %280 = vmatpush2.bf16.msra.mxu0 0
    %281 = vmatprep.subr.bf16.mxu0 0
    %282 = vmatpush2.bf16.msra.mxu0 0
    %283 = vmatprep.mubr.bf16.mxu0 0
    %284 = vmatmul.mubr.bf16.gmra.mxu0 %v179
    %v285 = vpop.f32.mrf.mxu0
    %v286 = vadd.f32 %v201, %v285
    %v287 = vpop.f32.mrf.mxu0
    %v288 = vpop.f32.mrf.mxu0
    %v289 = vadd.f32 %v201, %v288
    %v290 = vpop.f32.mrf.mxu0
    %291 = vdwg.mxu0
    %292 = vst [vmem:[#allocation8] sm:$0xff] %v286
    %293 = vst [vmem:[#allocation8 + $0x8] sm:$0xff] %v289
    // Predicated region
    $region34: #{tpu_custom_call.1} parent=1 // pred_check
      _
    $region35: #{tpu_custom_call.1} parent=1 // pred_check_branch
      %295 = sbr.rel (0) target = $region37
    $region36: #{tpu_custom_call.1} parent=1 // pred_region
      %s297 = ssub.s32 256, 256
      %298 = vsyncadd [#allocation4], %s297
      %s299 = sshll.u32 [#allocation8], 4
      %s300 = int_to_ptr.vmem [resolvable:$true] %s299
      %305 = dma.vmem_to_hbm [thread:$0]  %s300, 256, %s5, [#allocation4], 128, 128, 8
    $region37: #{tpu_custom_call.1} parent=1 // pred_fallthru
      _
    // Predicated region
    $region38: #{tpu_custom_call.1} parent=1 // pred_check
      _
    $region39: #{tpu_custom_call.1} parent=1 // pred_check_branch
      %307 = sbr.rel (0) target = $region41
    $region40: #{tpu_custom_call.1} parent=1 // pred_region
      %308 = dma.done [#allocation4], 256
    $region41: #{tpu_custom_call.1} parent=1 // pred_fallthru
      _
    %309 = vsyncpa [#allocation3], 1
    %310 = vsyncpa [#allocation6], 1
    %311 = vsyncpa [#allocation4], 1

</llo_original>
